<compile_context>
chip_gen: v6e
topology: v6e:2x2x1
jax: 0.10.0
libtpu: 0.0.40
codegen_flags: <defaults>
</compile_context>

<pallas_src>
import numpy as np
import jax
import jax.numpy as jnp
from jax.experimental import pallas as pl
from jax.experimental.pallas import tpu as pltpu

_LANE = 128
_SUBLANE = 8
_BLOCK_ROWS = 2048       # (2048,128) f32 tile = 1 MiB; 4 arrays x 2 buffers = 8 MiB
_BLOCK_ROWS_V7X = 4096   # v7x: 3.2 TB/s HBM -> amortize per-step overhead harder
_SQRT_2_OVER_PI = float(np.sqrt(2.0 / np.pi))


def _is_v7x():
    try:
        return "v7" in jax.devices()[0].device_kind.lower()
    except Exception:
        return False


def _pick_block_rows(rows):
    default = _BLOCK_ROWS_V7X if _is_v7x() else _BLOCK_ROWS
    # Single full-extent block for small inputs (block dim == array dim is
    # always a legal TPU block shape); otherwise a fixed, 8-aligned tall tile.
    return rows if rows <= default else default


def _nll_body(x, mean, logvar):
    """Elementwise discrete-Gaussian NLL in f32.

    Mathematically identical to the PyTorch reference, restructured to trim
    VALU work: base/delta factoring, cubic as u*(1 + c*u*u) reusing u*u, the
    0.5*(1+tanh) affine folded into the select branches, and a single clamped
    log on the selected probability (log is monotone, so select-then-log ==
    log-then-select with the same 1e-12 clamp).
    """
    inv_stdv = jnp.exp(-logvar)
    base = inv_stdv * (x - mean)
    delta = inv_stdv * (1.0 / 255.0)
    plus_in = base + delta
    min_in = base - delta
    tanh_plus = jnp.tanh(
        _SQRT_2_OVER_PI * (plus_in * (1.0 + 0.044715 * plus_in * plus_in)))
    tanh_min = jnp.tanh(
        _SQRT_2_OVER_PI * (min_in * (1.0 + 0.044715 * min_in * min_in)))
    # cdf_plus           = 0.5 * (1 + tanh_plus)
    # 1 - cdf_min        = 0.5 * (1 - tanh_min)
    # cdf_plus - cdf_min = 0.5 * (tanh_plus - tanh_min)
    sel = jnp.where(
        x < -0.999,
        1.0 + tanh_plus,
        jnp.where(x > 0.999, 1.0 - tanh_min, tanh_plus - tanh_min),
    )
    return -jnp.log(jnp.maximum(0.5 * sel, 1e-12))


def _nll_kernel(x_ref, mean_ref, logvar_ref, out_ref):
    x = x_ref[...].astype(jnp.float32)
    mean = mean_ref[...].astype(jnp.float32)
    logvar = logvar_ref[...].astype(jnp.float32)
    out_ref[...] = _nll_body(x, mean, logvar).astype(out_ref.dtype)


def _make_nll_sum_kernel(rows_valid, block_rows, blocks_per_shard, blocks_total,
                         acc_sublanes, needs_mask):
    """Fused reduction: per-(sublane, lane) partial sums accumulated across the grid."""

    def partial(v):
        if acc_sublanes == _SUBLANE:
            # Pure VPU adds collapse the tile into one (8,128) vreg-slab; the
            # cross-sublane/lane reduce happens once in the wrapper, not per step.
            return jnp.sum(v.reshape(-1, _SUBLANE, _LANE), axis=0, keepdims=True)
        return jnp.sum(v, axis=0, keepdims=True)[jnp.newaxis]

    def kernel(x_ref, mean_ref, logvar_ref, out_ref):
        i = pl.program_id(0)  # shard (parallel)
        j = pl.program_id(1)  # block within shard (arbitrary / reduction)

        @pl.when(j == 0)
        def _():
            out_ref[...] = jnp.zeros_like(out_ref)

        x = x_ref[...].astype(jnp.float32)
        mean = mean_ref[...].astype(jnp.float32)
        logvar = logvar_ref[...].astype(jnp.float32)
        nll = _nll_body(x, mean, logvar)

        if needs_mask:
            # Only the global last block can hold invalid rows; every earlier
            # block accumulates unmasked (no per-element iota/compare/select).
            g = i * blocks_per_shard + j

            @pl.when(g != blocks_total - 1)
            def _():
                out_ref[...] += partial(nll)

            @pl.when(g == blocks_total - 1)
            def _():
                row_ids = (jax.lax.broadcasted_iota(jnp.int32, nll.shape, 0)
                           + g * block_rows)
                # Select (not multiply): garbage tail rows may hold Inf/NaN.
                masked = jnp.where(row_ids < rows_valid, nll, 0.0)
                out_ref[...] += partial(masked)
        else:
            out_ref[...] += partial(nll)

    return kernel


def discrete_gaussian_nll_loss(x_true, mean, logvar, reduce=False):
    assert x_true.shape == mean.shape == logvar.shape
    orig_shape = x_true.shape
    orig_dtype = x_true.dtype

    x_f = x_true.reshape(-1)
    m_f = mean.reshape(-1)
    lv_f = logvar.reshape(-1)
    n = x_f.shape[0]

    # Lane-align by splitting off the (<128 element) ragged tail and computing
    # it in plain JAX, instead of padding/copying all three inputs through HBM.
    # For typical image tensors n % 128 == 0 and this is a no-op.
    n_main = (n // _LANE) * _LANE
    has_tail = n_main != n
    if has_tail:
        tail_nll = _nll_body(x_f[n_main:].astype(jnp.float32),
                             m_f[n_main:].astype(jnp.float32),
                             lv_f[n_main:].astype(jnp.float32))

    if n_main == 0:
        # Tiny input: pure-JAX fallback (not worth a kernel launch).
        if reduce:
            return jnp.mean(tail_nll).astype(orig_dtype)
        return tail_nll.astype(orig_dtype).reshape(orig_shape)

    rows = n_main // _LANE
    block_rows = _pick_block_rows(rows)
    num_blocks = pl.cdiv(rows, block_rows)

    x2 = x_f[:n_main].reshape(rows, _LANE)
    m2 = m_f[:n_main].reshape(rows, _LANE)
    lv2 = lv_f[:n_main].reshape(rows, _LANE)

    if not reduce:
        in_spec = pl.BlockSpec((block_rows, _LANE), lambda i: (i, 0))
        nll2 = pl.pallas_call(
            _nll_kernel,
            out_shape=jax.ShapeDtypeStruct((rows, _LANE), orig_dtype),
            grid_spec=pltpu.PrefetchScalarGridSpec(
                num_scalar_prefetch=0,
                grid=(num_blocks,),
                in_specs=[in_spec, in_spec, in_spec],
                out_specs=pl.BlockSpec((block_rows, _LANE), lambda i: (i, 0)),
            ),
            compiler_params=pltpu.CompilerParams(
                dimension_semantics=("parallel",),
            ),
        )(x2, m2, lv2)
        nll = nll2.reshape(-1)
        if has_tail:
            nll = jnp.concatenate([nll, tail_nll.astype(orig_dtype)])
        return nll.reshape(orig_shape)

    # reduce=True: fuse the sum into the kernel so the full NLL tensor never
    # hits HBM.  Leading "parallel" shard axis -> both v7x TensorCores work;
    # the inner "arbitrary" axis carries the resident accumulator block.
    num_shards = 2 if (num_blocks >= 2 and num_blocks % 2 == 0) else 1
    blocks_per_shard = num_blocks // num_shards
    needs_mask = (rows % block_rows) != 0
    acc_sublanes = _SUBLANE if block_rows % _SUBLANE == 0 else 1

    def in_map(i, j):
        return (i * blocks_per_shard + j, 0)

    in_spec = pl.BlockSpec((block_rows, _LANE), in_map)
    lane_sums = pl.pallas_call(
        _make_nll_sum_kernel(rows, block_rows, blocks_per_shard, num_blocks,
                             acc_sublanes, needs_mask),
        out_shape=jax.ShapeDtypeStruct((num_shards, acc_sublanes, _LANE),
                                       jnp.float32),
        grid_spec=pltpu.PrefetchScalarGridSpec(
            num_scalar_prefetch=0,
            grid=(num_shards, blocks_per_shard),
            in_specs=[in_spec, in_spec, in_spec],
            out_specs=pl.BlockSpec((1, acc_sublanes, _LANE),
                                   lambda i, j: (i, 0, 0)),
        ),
        compiler_params=pltpu.CompilerParams(
            dimension_semantics=("parallel", "arbitrary"),
        ),
    )(x2, m2, lv2)

    total = jnp.sum(lane_sums)
    if has_tail:
        total = total + jnp.sum(tail_nll)
    return (total / n).astype(orig_dtype)


def _reference_nll(x_true, mean, logvar):
    # Pure-JAX transliteration of the PyTorch module (correctness reference).
    centered_x = x_true - mean
    inv_stdv = jnp.exp(-logvar)
    cdf = lambda v: 0.5 * (1.0 + jnp.tanh(_SQRT_2_OVER_PI * (v + 0.044715 * v ** 3)))
    cdf_plus = cdf(inv_stdv * (centered_x + 1.0 / 255.0))
    cdf_min = cdf(inv_stdv * (centered_x - 1.0 / 255.0))
    log_cdf_plus = jnp.log(jnp.maximum(cdf_plus, 1e-12))
    log_one_minus_cdf_min = jnp.log(jnp.maximum(1.0 - cdf_min, 1e-12))
    log_cdf_delta = jnp.log(jnp.maximum(cdf_plus - cdf_min, 1e-12))
    log_probs = jnp.where(
        x_true < -0.999, log_cdf_plus,
        jnp.where(x_true > 0.999, log_one_minus_cdf_min, log_cdf_delta))
    return -log_probs


if __name__ == "__main__":
    key = jax.random.PRNGKey(0)
    k1, k2, k3 = jax.random.split(key, 3)
    B, C, H, W = 2, 4, 16, 16  # NCHW, like the PyTorch module's inputs

    # Realistic discretized-Gaussian inputs: x_true on the 256-level grid in
    # [-1, 1] (exercises the <-0.999 / >0.999 branches), the predicted mean
    # close to x_true, moderate logvar.  This keeps cdf_plus - cdf_min
    # well-conditioned so the few-ulp tanh/exp differences between the Mosaic
    # (EUP) and XLA lowerings are not amplified past the 5e-3 tolerance.
    x_int = jax.random.randint(k1, (B, C, H, W), 0, 256)
    x_true = x_int.astype(jnp.float32) / 127.5 - 1.0
    mean = x_true + 0.15 * jax.random.normal(k2, (B, C, H, W), jnp.float32)
    logvar = jax.random.uniform(k3, (B, C, H, W), jnp.float32,
                                minval=-0.7, maxval=0.7)

    nll = jax.block_until_ready(
        discrete_gaussian_nll_loss(x_true, mean, logvar, reduce=False))
    ref = _reference_nll(x_true, mean, logvar)
    assert nll.shape == x_true.shape and nll.dtype == x_true.dtype
    np.testing.assert_allclose(np.asarray(nll), np.asarray(ref),
                               rtol=5e-3, atol=5e-3)

    nll_mean = jax.block_until_ready(
        discrete_gaussian_nll_loss(x_true, mean, logvar, reduce=True))
    np.testing.assert_allclose(np.asarray(nll_mean), np.asarray(ref).mean(),
                               rtol=5e-3, atol=5e-3)

    # Ragged (non-lane-aligned) shape: exercises the pure-JAX tail path and the
    # small single-block kernel path.
    xr = x_true.reshape(-1)[:210].reshape(3, 70)
    mr = mean.reshape(-1)[:210].reshape(3, 70)
    lvr = logvar.reshape(-1)[:210].reshape(3, 70)
    nll_r = jax.block_until_ready(
        discrete_gaussian_nll_loss(xr, mr, lvr, reduce=False))
    ref_r = _reference_nll(xr, mr, lvr)
    np.testing.assert_allclose(np.asarray(nll_r), np.asarray(ref_r),
                               rtol=5e-3, atol=5e-3)
    nll_r_mean = jax.block_until_ready(
        discrete_gaussian_nll_loss(xr, mr, lvr, reduce=True))
    np.testing.assert_allclose(np.asarray(nll_r_mean), np.asarray(ref_r).mean(),
                               rtol=5e-3, atol=5e-3)

    print("KERNEL_OK")
</pallas_src>

<mosaic_0001>
module attributes {stable_mosaic.version = 11 : i64} {
  func.func @_nll_kernel(%arg0: i32, %arg1: memref<16x128xf32, #tpu.memory_space<vmem>>, %arg2: memref<16x128xf32, #tpu.memory_space<vmem>>, %arg3: memref<16x128xf32, #tpu.memory_space<vmem>>, %arg4: memref<16x128xf32, #tpu.memory_space<vmem>>) attributes {dimension_semantics = [#tpu.dimension_semantics<parallel>], iteration_bounds = array<i64: 1>, scalar_prefetch = 0 : i64, scratch_operands = 0 : i64, tpu.core_type = #tpu.core_type<tc>, window_params = [{transform_indices = @transform_0, window_bounds = array<i64: 16, 128>}, {transform_indices = @transform_1, window_bounds = array<i64: 16, 128>}, {transform_indices = @transform_2, window_bounds = array<i64: 16, 128>}, {transform_indices = @transform_3, window_bounds = array<i64: 16, 128>}]} {
    %c0 = arith.constant 0 : index
    %c0_0 = arith.constant 0 : index
    %0 = vector.load %arg1[%c0, %c0_0] : memref<16x128xf32, #tpu.memory_space<vmem>>, vector<16x128xf32>
    %c0_1 = arith.constant 0 : index
    %c0_2 = arith.constant 0 : index
    %1 = vector.load %arg2[%c0_1, %c0_2] : memref<16x128xf32, #tpu.memory_space<vmem>>, vector<16x128xf32>
    %c0_3 = arith.constant 0 : index
    %c0_4 = arith.constant 0 : index
    %2 = vector.load %arg3[%c0_3, %c0_4] : memref<16x128xf32, #tpu.memory_space<vmem>>, vector<16x128xf32>
    %cst = arith.constant 0.000000e+00 : f32
    %3 = vector.broadcast %cst : f32 to vector<16x128xf32>
    %4 = arith.subf %3, %2 : vector<16x128xf32>
    %5 = math.exp %4 : vector<16x128xf32>
    %6 = arith.subf %0, %1 : vector<16x128xf32>
    %7 = arith.mulf %5, %6 : vector<16x128xf32>
    %cst_5 = arith.constant 0.00392156886 : f32
    %8 = vector.broadcast %cst_5 : f32 to vector<16x128xf32>
    %9 = arith.mulf %5, %8 : vector<16x128xf32>
    %10 = arith.addf %7, %9 : vector<16x128xf32>
    %11 = arith.subf %7, %9 : vector<16x128xf32>
    %cst_6 = arith.constant 4.471500e-02 : f32
    %12 = vector.broadcast %cst_6 : f32 to vector<16x128xf32>
    %13 = arith.mulf %12, %10 : vector<16x128xf32>
    %14 = arith.mulf %13, %10 : vector<16x128xf32>
    %cst_7 = arith.constant 1.000000e+00 : f32
    %15 = vector.broadcast %cst_7 : f32 to vector<16x128xf32>
    %16 = arith.addf %15, %14 : vector<16x128xf32>
    %17 = arith.mulf %10, %16 : vector<16x128xf32>
    %cst_8 = arith.constant 0.797884583 : f32
    %18 = vector.broadcast %cst_8 : f32 to vector<16x128xf32>
    %19 = arith.mulf %18, %17 : vector<16x128xf32>
    %20 = math.tanh %19 : vector<16x128xf32>
    %cst_9 = arith.constant 4.471500e-02 : f32
    %21 = vector.broadcast %cst_9 : f32 to vector<16x128xf32>
    %22 = arith.mulf %21, %11 : vector<16x128xf32>
    %23 = arith.mulf %22, %11 : vector<16x128xf32>
    %cst_10 = arith.constant 1.000000e+00 : f32
    %24 = vector.broadcast %cst_10 : f32 to vector<16x128xf32>
    %25 = arith.addf %24, %23 : vector<16x128xf32>
    %26 = arith.mulf %11, %25 : vector<16x128xf32>
    %cst_11 = arith.constant 0.797884583 : f32
    %27 = vector.broadcast %cst_11 : f32 to vector<16x128xf32>
    %28 = arith.mulf %27, %26 : vector<16x128xf32>
    %29 = math.tanh %28 : vector<16x128xf32>
    %cst_12 = arith.constant -9.990000e-01 : f32
    %30 = vector.broadcast %cst_12 : f32 to vector<16x128xf32>
    %31 = arith.cmpf olt, %0, %30 : vector<16x128xf32>
    %cst_13 = arith.constant 1.000000e+00 : f32
    %32 = vector.broadcast %cst_13 : f32 to vector<16x128xf32>
    %33 = arith.addf %32, %20 : vector<16x128xf32>
    %cst_14 = arith.constant 9.990000e-01 : f32
    %34 = vector.broadcast %cst_14 : f32 to vector<16x128xf32>
    %35 = arith.cmpf ogt, %0, %34 : vector<16x128xf32>
    %cst_15 = arith.constant 1.000000e+00 : f32
    %36 = vector.broadcast %cst_15 : f32 to vector<16x128xf32>
    %37 = arith.subf %36, %29 : vector<16x128xf32>
    %38 = arith.subf %20, %29 : vector<16x128xf32>
    %39 = arith.select %35, %37, %38 : vector<16x128xi1>, vector<16x128xf32>
    %40 = arith.select %31, %33, %39 : vector<16x128xi1>, vector<16x128xf32>
    %cst_16 = arith.constant 5.000000e-01 : f32
    %41 = vector.broadcast %cst_16 : f32 to vector<16x128xf32>
    %42 = arith.mulf %41, %40 : vector<16x128xf32>
    %cst_17 = arith.constant 9.99999996E-13 : f32
    %43 = vector.broadcast %cst_17 : f32 to vector<16x128xf32>
    %44 = arith.maximumf %42, %43 : vector<16x128xf32>
    %45 = math.log %44 : vector<16x128xf32>
    %cst_18 = arith.constant 0.000000e+00 : f32
    %46 = vector.broadcast %cst_18 : f32 to vector<16x128xf32>
    %47 = arith.subf %46, %45 : vector<16x128xf32>
    %c0_19 = arith.constant 0 : index
    %c0_20 = arith.constant 0 : index
    %48 = vector.load %arg4[%c0_19, %c0_20] : memref<16x128xf32, #tpu.memory_space<vmem>>, vector<16x128xf32>
    tpu.vector_store %arg4[%c0_19, %c0_20], %47 {strides = array<i32>} : memref<16x128xf32, #tpu.memory_space<vmem>>, vector<16x128xf32>,
    return
  }
  func.func @transform_0(%arg0: i32) -> (i32, i32) {
    %c0_i32 = arith.constant 0 : i32
    %c0_i32_0 = arith.constant 0 : i32
    return %arg0, %c0_i32 : i32, i32
  }
  func.func @transform_1(%arg0: i32) -> (i32, i32) {
    %c0_i32 = arith.constant 0 : i32
    %c0_i32_0 = arith.constant 0 : i32
    return %arg0, %c0_i32 : i32, i32
  }
  func.func @transform_2(%arg0: i32) -> (i32, i32) {
    %c0_i32 = arith.constant 0 : i32
    %c0_i32_0 = arith.constant 0 : i32
    return %arg0, %c0_i32 : i32, i32
  }
  func.func @transform_3(%arg0: i32) -> (i32, i32) {
    %c0_i32 = arith.constant 0 : i32
    %c0_i32_0 = arith.constant 0 : i32
    return %arg0, %c0_i32 : i32, i32
  }
}

</mosaic_0001>

<llo_original>
// kernel: tpu_custom_call.1
$region0: #{tpu_custom_call.1}
  #allocation0 [shape = 'u32[]', space=smem, size = 0x4, offset = 0x4, fixed_abs, tag = 'smem constant byte address 0x4 - core index']
  #allocation1 [shape = 'u32[144,128]{1,0:T(1,128)}', space=vmem, size = 0x12000, scoped, tag = 'internal scratch']
  %s0 = inlined_call_operand.hbm [shape: f32[16,128], index: 0, kind: input, shape index: {}]
  %s1 = inlined_call_operand.hbm [shape: f32[16,128], index: 1, kind: input, shape index: {}]
  %s2 = inlined_call_operand.hbm [shape: f32[16,128], index: 2, kind: input, shape index: {}]
  %s3 = inlined_call_operand.hbm [shape: f32[16,128], index: 3, kind: output, shape index: {}]
  %s4 = sld [smem:[#allocation0]]
  $region34: #{tpu_custom_call.1} parent=0
    _
  %s6 = ssub.s32 1, %s4
  %s7 = scalar_select 0, %s6, %s4
  $region1: #{tpu_custom_call.1} parent=0
    #allocation2 [shape = 'u8[8192]{0}', space=vmem, size = 0x2000, scoped, tag = 'input window, operand 0, single buffered']
    #allocation3 [shape = 's32[1]{0}', space=sflag, size = 0x4, scoped, tag = 'scoped memory for tpu_custom_call.1']
    #allocation4 [shape = 's32[1]{0}', space=sflag, size = 0x4, scoped, tag = 'scoped memory for tpu_custom_call.1']
    #allocation5 [shape = 'u8[8192]{0}', space=vmem, size = 0x2000, scoped, tag = 'input window, operand 1, single buffered']
    #allocation6 [shape = 's32[1]{0}', space=sflag, size = 0x4, scoped, tag = 'scoped memory for tpu_custom_call.1']
    #allocation7 [shape = 'u8[8192]{0}', space=vmem, size = 0x2000, scoped, tag = 'input window, operand 2, single buffered']
    #allocation8 [shape = 'u8[8192]{0}', space=vmem, size = 0x2000, scoped, tag = 'output window, operand 0, single buffered']
    %8 = vsyncpa [#allocation3], 0
    %9 = vsyncpa [#allocation6], 0
    %10 = vsyncpa [#allocation4], 0
    // Predicated region
    $region2: #{tpu_custom_call.1} parent=1 // pred_check
      _
    $region3: #{tpu_custom_call.1} parent=1 // pred_check_branch
      %12 = sbr.rel (0) target = $region5
    $region4: #{tpu_custom_call.1} parent=1 // pred_region
      %s14 = ssub.s32 256, 256
      %15 = vsyncadd [#allocation3], %s14
      %s16 = sshll.u32 [#allocation2], 4
      %s17 = int_to_ptr.vmem [resolvable:$true] %s16
      %22 = dma.hbm_to_vmem [thread:$0]  %s0, 256, %s17, [#allocation3], 128, 128, 8
    $region5: #{tpu_custom_call.1} parent=1 // pred_fallthru
      _
    // Predicated region
    $region6: #{tpu_custom_call.1} parent=1 // pred_check
      _
    $region7: #{tpu_custom_call.1} parent=1 // pred_check_branch
      %24 = sbr.rel (0) target = $region9
    $region8: #{tpu_custom_call.1} parent=1 // pred_region
      %s26 = ssub.s32 256, 256
      %27 = vsyncadd [#allocation6], %s26
      %s28 = sshll.u32 [#allocation5], 4
      %s29 = int_to_ptr.vmem [resolvable:$true] %s28
      %34 = dma.hbm_to_vmem [thread:$0]  %s1, 256, %s29, [#allocation6], 128, 128, 8
    $region9: #{tpu_custom_call.1} parent=1 // pred_fallthru
      _
    // Predicated region
    $region10: #{tpu_custom_call.1} parent=1 // pred_check
      _
    $region11: #{tpu_custom_call.1} parent=1 // pred_check_branch
      %36 = sbr.rel (0) target = $region13
    $region12: #{tpu_custom_call.1} parent=1 // pred_region
      %s38 = ssub.s32 256, 256
      %39 = vsyncadd [#allocation6], %s38
      %s40 = sshll.u32 [#allocation7], 4
      %s41 = int_to_ptr.vmem [resolvable:$true] %s40
      %46 = dma.hbm_to_vmem [thread:$0]  %s2, 256, %s41, [#allocation6], 128, 128, 8
    $region13: #{tpu_custom_call.1} parent=1 // pred_fallthru
      _
    // Predicated region
    $region14: #{tpu_custom_call.1} parent=1 // pred_check
      _
    $region15: #{tpu_custom_call.1} parent=1 // pred_check_branch
      %48 = sbr.rel (0) target = $region17
    $region16: #{tpu_custom_call.1} parent=1 // pred_region
      %49 = dma.done [#allocation3], 256
    $region17: #{tpu_custom_call.1} parent=1 // pred_fallthru
      _
    // Predicated region
    $region18: #{tpu_custom_call.1} parent=1 // pred_check
      _
    $region19: #{tpu_custom_call.1} parent=1 // pred_check_branch
      %51 = sbr.rel (0) target = $region21
    $region20: #{tpu_custom_call.1} parent=1 // pred_region
      %52 = dma.done [#allocation6], 256
    $region21: #{tpu_custom_call.1} parent=1 // pred_fallthru
      _
    // Predicated region
    $region22: #{tpu_custom_call.1} parent=1 // pred_check
      _
    $region23: #{tpu_custom_call.1} parent=1 // pred_check_branch
      %54 = sbr.rel (0) target = $region25
    $region24: #{tpu_custom_call.1} parent=1 // pred_region
      %55 = dma.done [#allocation6], 256
    $region25: #{tpu_custom_call.1} parent=1 // pred_fallthru
      _
    %v56 = vld [vmem:[#allocation2] sm:$0xff]
    %v57 = vld [vmem:[#allocation2 + $0x8] sm:$0xff]
    %v58 = vld [vmem:[#allocation5] sm:$0xff]
    %v59 = vld [vmem:[#allocation5 + $0x8] sm:$0xff]
    %v60 = vld [vmem:[#allocation7] sm:$0xff]
    %v61 = vld [vmem:[#allocation7 + $0x8] sm:$0xff]
    %v62 = vsub.f32 0.0, %v60
    %v63 = vsub.f32 0.0, %v61
    %v64 = vmul.f32 %v62, 1.442695
    %v65 = vpow.pop %v64
    %v66 = vmul.f32 %v63, 1.442695
    %v67 = vpow.pop %v66
    %v68 = vsub.f32 %v56, %v58
    %v69 = vsub.f32 %v57, %v59
    %v70 = vmul.f32 %v65, %v68
    %v71 = vmul.f32 %v67, %v69
    %v72 = vmul.f32 %v65, 0.003921569
    %v73 = vmul.f32 %v67, 0.003921569
    %v74 = vadd.f32 %v70, %v72
    %v75 = vadd.f32 %v71, %v73
    %v76 = vsub.f32 %v70, %v72
    %v77 = vsub.f32 %v71, %v73
    %v78 = vmul.f32 %v74, 0.044715
    %v79 = vmul.f32 %v75, 0.044715
    %v80 = vmul.f32 %v78, %v74
    %v81 = vmul.f32 %v79, %v75
    %v82 = vadd.f32 %v80, 1.0
    %v83 = vadd.f32 %v81, 1.0
    %v84 = vmul.f32 %v74, %v82
    %v85 = vmul.f32 %v75, %v83
    %v86 = vmul.f32 %v84, 0.7978846
    %v87 = vmul.f32 %v85, 0.7978846
    %v88 = vtanh.pop %v86
    %v89 = vtanh.pop %v87
    %v90 = vmul.f32 %v76, 0.044715
    %v91 = vmul.f32 %v77, 0.044715
    %v92 = vmul.f32 %v90, %v76
    %v93 = vmul.f32 %v91, %v77
    %v94 = vadd.f32 %v92, 1.0
    %v95 = vadd.f32 %v93, 1.0
    %v96 = vmul.f32 %v76, %v94
    %v97 = vmul.f32 %v77, %v95
    %v98 = vmul.f32 %v96, 0.7978846
    %v99 = vmul.f32 %v97, 0.7978846
    %v100 = vtanh.pop %v98
    %v101 = vtanh.pop %v99
    %vm102 = vcmp.lt.f32.partialorder %v56, -0.999
    %vm103 = vcmp.lt.f32.partialorder %v57, -0.999
    %v104 = vadd.f32 %v88, 1.0
    %v105 = vadd.f32 %v89, 1.0
    %vm106 = vcmp.gt.f32.partialorder %v56, 0.999
    %vm107 = vcmp.gt.f32.partialorder %v57, 0.999
    %v108 = vsub.f32 1.0, %v100
    %v109 = vsub.f32 1.0, %v101
    %v110 = vsub.f32 %v88, %v100
    %v111 = vsub.f32 %v89, %v101
    %v112 = vsel %vm106, %v108, %v110
    %v113 = vsel %vm107, %v109, %v111
    %v114 = vsel %vm102, %v104, %v112
    %v115 = vsel %vm103, %v105, %v113
    %v116 = vmul.f32 %v114, 0.5
    %v117 = vmul.f32 %v115, 0.5
    %v118 = vmax.f32 %v116, 1e-12
    %v119 = vmax.f32 %v117, 1e-12
    %v120 = vlog2.pop %v118
    %v121 = vmul.f32 %v120, 0.6931472
    %v122 = vlog2.pop %v119
    %v123 = vmul.f32 %v122, 0.6931472
    %v124 = vsub.f32 0.0, %v121
    %v125 = vsub.f32 0.0, %v123
    %126 = vst [vmem:[#allocation8] sm:$0xff] %v124
    %127 = vst [vmem:[#allocation8 + $0x8] sm:$0xff] %v125
    // Predicated region
    $region26: #{tpu_custom_call.1} parent=1 // pred_check
      _
    $region27: #{tpu_custom_call.1} parent=1 // pred_check_branch
      %129 = sbr.rel (0) target = $region29
    $region28: #{tpu_custom_call.1} parent=1 // pred_region
      %s131 = ssub.s32 256, 256
      %132 = vsyncadd [#allocation4], %s131
      %s133 = sshll.u32 [#allocation8], 4
      %s134 = int_to_ptr.vmem [resolvable:$true] %s133
      %139 = dma.vmem_to_hbm [thread:$0]  %s134, 256, %s3, [#allocation4], 128, 128, 8
    $region29: #{tpu_custom_call.1} parent=1 // pred_fallthru
      _
    // Predicated region
    $region30: #{tpu_custom_call.1} parent=1 // pred_check
      _
    $region31: #{tpu_custom_call.1} parent=1 // pred_check_branch
      %141 = sbr.rel (0) target = $region33
    $region32: #{tpu_custom_call.1} parent=1 // pred_region
      %142 = dma.done [#allocation4], 256
    $region33: #{tpu_custom_call.1} parent=1 // pred_fallthru
      _
    %143 = vsyncpa [#allocation3], 1
    %144 = vsyncpa [#allocation6], 1
    %145 = vsyncpa [#allocation4], 1

</llo_original>
